<compile_context>
chip_gen: v5e
topology: v5e:2x2
jax: 0.10.0
libtpu: 0.0.40
codegen_flags: <defaults>
</compile_context>

<pallas_src>
import functools

import jax
import jax.numpy as jnp
import numpy as np
from jax.experimental import pallas as pl
from jax.experimental.pallas import tpu as pltpu

N_HARMONICS = 3
LANES = 128
SUBLANES = 8
MAX_TILE_ROWS = 512          # 512 * 128 * 4 B = 256 KiB per block


# ---------------------------------------------------------------------------
# Parameter initialization (mirrors HarmonicSpectralFilter.__init__ defaults,
# plus a small deterministic perturbation).
# ---------------------------------------------------------------------------
def init_params(key):
    keys = jax.random.split(key, 5)
    eps = lambda k, shape=(): 0.05 * jax.random.normal(k, shape, jnp.float32)
    return {
        "fundamental_freq": jnp.float32(0.5) + eps(keys[0]),
        "harmonic_weights": jnp.ones((N_HARMONICS,), jnp.float32)
                            + eps(keys[1], (N_HARMONICS,)),
        "harmonic_widths": jnp.full((N_HARMONICS,), 0.1, jnp.float32)
                           + eps(keys[2], (N_HARMONICS,)),
        "base_level": jnp.float32(0.1) + eps(keys[3]),
        "decay_rate": jnp.float32(1.0) + eps(keys[4]),
    }


# ---------------------------------------------------------------------------
# Parameter-only math (glue, plain JAX): 11 scalar constants for the kernel.
#   [0] base                      = sigmoid(base_level) * 0.3
#   [1] inv_max                   = 2 / (max_eig + 1e-8)
#   [2 + 3*i + 0] amp_i           = sigmoid(w_i) * exp(-decay*i*0.5) * [f_i < 2]
#   [2 + 3*i + 1] freq_i          = fund_freq * (i + 1)
#   [2 + 3*i + 2] inv_width_i     = 1 / (sigmoid(width_i)*0.3 + 0.05)
# ---------------------------------------------------------------------------
def derive_constants(params, max_eig):
    base = jax.nn.sigmoid(params["base_level"]) * 0.3
    fund = jax.nn.sigmoid(params["fundamental_freq"]) * 1.5 + 0.1
    inv_max = 2.0 / (max_eig + 1e-8)

    consts = [base, inv_max]
    for i in range(N_HARMONICS):
        hf = fund * (i + 1)
        w = jax.nn.sigmoid(params["harmonic_weights"][i])
        width = jax.nn.sigmoid(params["harmonic_widths"][i]) * 0.3 + 0.05
        decay = jnp.exp(-params["decay_rate"] * (i * 0.5))
        # torch does a Python-level `if harmonic_freq < 2.0:`; here the gate is
        # folded into the (parameter-only) amplitude.
        amp = jnp.where(hf < 2.0, w * decay, 0.0)
        consts += [amp, hf, 1.0 / width]
    return jnp.stack(consts).astype(jnp.float32)          # shape (11,)


# ---------------------------------------------------------------------------
# Pallas kernel: per-eigenvalue hot path (one (tile_rows, 128) block per step).
# ---------------------------------------------------------------------------
def _harmonic_filter_kernel(c_ref, eig_ref, out_ref):
    # Hoist all scalar constants (SMEM -> sregs) once.
    base = c_ref[0]
    inv_max = c_ref[1]
    amp0, f0, iw0 = c_ref[2], c_ref[3], c_ref[4]
    amp1, f1, iw1 = c_ref[5], c_ref[6], c_ref[7]
    amp2, f2, iw2 = c_ref[8], c_ref[9], c_ref[10]

    norm = eig_ref[...] * inv_max                 # eig / max * 2 (scaled recip)

    d0 = (norm - f0) * iw0
    d1 = (norm - f1) * iw1
    d2 = (norm - f2) * iw2

    resp = (base
            + amp0 * jnp.exp(-(d0 * d0))
            + amp1 * jnp.exp(-(d1 * d1))
            + amp2 * jnp.exp(-(d2 * d2)))

    out_ref[...] = jnp.clip(resp, 1e-6, 1.0)


# ---------------------------------------------------------------------------
# Wrapper: max reduction + constant derivation outside, tiled kernel inside.
# ---------------------------------------------------------------------------
@functools.partial(jax.jit)
def harmonic_spectral_filter(eigenvalues, params):
    eig = eigenvalues.astype(jnp.float32)
    n = eig.shape[0]

    max_eig = jnp.max(eig)                        # global max moved out of kernel
    consts = derive_constants(params, max_eig)

    # Lane-dense layout: rows of 128, rows padded to a multiple of 8 (full
    # (8,128) tiles), then to a multiple of the row-tile size.
    rows = -(-n // LANES)
    rows8 = -(-rows // SUBLANES) * SUBLANES
    tile_rows = min(MAX_TILE_ROWS, rows8)
    rows_padded = -(-rows8 // tile_rows) * tile_rows
    total = rows_padded * LANES
    if total != n:
        eig = jnp.pad(eig, (0, total - n))        # pad only the ragged tail
    eig2d = eig.reshape(rows_padded, LANES)
    num_tiles = rows_padded // tile_rows

    cost = pl.CostEstimate(
        flops=18 * total,
        transcendentals=3 * total,
        bytes_accessed=8 * total + 4 * consts.shape[0],
    )

    out2d = pl.pallas_call(
        _harmonic_filter_kernel,
        out_shape=jax.ShapeDtypeStruct((rows_padded, LANES), jnp.float32),
        grid_spec=pltpu.PrefetchScalarGridSpec(
            num_scalar_prefetch=1,                # consts -> SMEM
            grid=(num_tiles,),
            in_specs=[pl.BlockSpec((tile_rows, LANES), lambda i, c: (i, 0))],
            out_specs=pl.BlockSpec((tile_rows, LANES), lambda i, c: (i, 0)),
        ),
        compiler_params=pltpu.CompilerParams(
            dimension_semantics=("parallel",)),   # megacore sharding on v7x
        cost_estimate=cost,
    )(consts, eig2d)

    return out2d.reshape(-1)[:n]


# ---------------------------------------------------------------------------
# Pure-JAX reference (same math as the torch forward), for validation.
# ---------------------------------------------------------------------------
def reference_forward(eigenvalues, params):
    eig = eigenvalues.astype(jnp.float32)
    max_eig = jnp.max(eig) + 1e-8
    norm = eig / max_eig * 2.0

    base = jax.nn.sigmoid(params["base_level"]) * 0.3
    resp = base * jnp.ones_like(norm)
    fund = jax.nn.sigmoid(params["fundamental_freq"]) * 1.5 + 0.1
    for i in range(N_HARMONICS):
        hf = fund * (i + 1)
        w = jax.nn.sigmoid(params["harmonic_weights"][i])
        width = jax.nn.sigmoid(params["harmonic_widths"][i]) * 0.3 + 0.05
        decay = jnp.exp(-params["decay_rate"] * i * 0.5)
        hr = w * decay * jnp.exp(-((norm - hf) / width) ** 2)
        resp = resp + jnp.where(hf < 2.0, hr, 0.0)
    return jnp.clip(resp, 1e-6, 1.0)


if __name__ == "__main__":
    key = jax.random.PRNGKey(0)
    k_param, k_eig = jax.random.split(key)

    params = init_params(k_param)

    # Synthetic Laplacian-like spectrum: 256 non-negative sorted eigenvalues.
    N = 256
    eigenvalues = jnp.sort(jax.random.uniform(k_eig, (N,), jnp.float32,
                                              minval=0.0, maxval=2.0))

    out = harmonic_spectral_filter(eigenvalues, params)
    out = jax.block_until_ready(out)

    ref = reference_forward(eigenvalues, params)
    np.testing.assert_allclose(np.asarray(out), np.asarray(ref),
                               rtol=2e-5, atol=2e-6)
    assert out.shape == (N,) and out.dtype == jnp.float32

    print("KERNEL_OK")
</pallas_src>

<mosaic_0001>
module attributes {stable_mosaic.version = 11 : i64} {
  func.func @_harmonic_filter_kernel(%arg0: i32, %arg1: memref<11xf32, #tpu.memory_space<smem>>, %arg2: memref<8x128xf32, #tpu.memory_space<vmem>>, %arg3: memref<8x128xf32, #tpu.memory_space<vmem>>) attributes {dimension_semantics = [#tpu.dimension_semantics<parallel>], iteration_bounds = array<i64: 1>, scalar_prefetch = 1 : i64, scratch_operands = 0 : i64, tpu.core_type = #tpu.core_type<tc>, window_params = [{transform_indices = @transform_0, window_bounds = array<i64: 8, 128>}, {transform_indices = @transform_1, window_bounds = array<i64: 8, 128>}]} {
    %c0 = arith.constant 0 : index
    %0 = memref.load %arg1[%c0] : memref<11xf32, #tpu.memory_space<smem>>
    %c1 = arith.constant 1 : index
    %1 = memref.load %arg1[%c1] : memref<11xf32, #tpu.memory_space<smem>>
    %c2 = arith.constant 2 : index
    %2 = memref.load %arg1[%c2] : memref<11xf32, #tpu.memory_space<smem>>
    %c3 = arith.constant 3 : index
    %3 = memref.load %arg1[%c3] : memref<11xf32, #tpu.memory_space<smem>>
    %c4 = arith.constant 4 : index
    %4 = memref.load %arg1[%c4] : memref<11xf32, #tpu.memory_space<smem>>
    %c5 = arith.constant 5 : index
    %5 = memref.load %arg1[%c5] : memref<11xf32, #tpu.memory_space<smem>>
    %c6 = arith.constant 6 : index
    %6 = memref.load %arg1[%c6] : memref<11xf32, #tpu.memory_space<smem>>
    %c7 = arith.constant 7 : index
    %7 = memref.load %arg1[%c7] : memref<11xf32, #tpu.memory_space<smem>>
    %c8 = arith.constant 8 : index
    %8 = memref.load %arg1[%c8] : memref<11xf32, #tpu.memory_space<smem>>
    %c9 = arith.constant 9 : index
    %9 = memref.load %arg1[%c9] : memref<11xf32, #tpu.memory_space<smem>>
    %c10 = arith.constant 10 : index
    %10 = memref.load %arg1[%c10] : memref<11xf32, #tpu.memory_space<smem>>
    %c0_0 = arith.constant 0 : index
    %c0_1 = arith.constant 0 : index
    %11 = vector.load %arg2[%c0_0, %c0_1] : memref<8x128xf32, #tpu.memory_space<vmem>>, vector<8x128xf32>
    %12 = vector.broadcast %1 : f32 to vector<8x128xf32>
    %13 = arith.mulf %11, %12 : vector<8x128xf32>
    %14 = vector.broadcast %3 : f32 to vector<8x128xf32>
    %15 = arith.subf %13, %14 : vector<8x128xf32>
    %16 = vector.broadcast %4 : f32 to vector<8x128xf32>
    %17 = arith.mulf %15, %16 : vector<8x128xf32>
    %18 = vector.broadcast %6 : f32 to vector<8x128xf32>
    %19 = arith.subf %13, %18 : vector<8x128xf32>
    %20 = vector.broadcast %7 : f32 to vector<8x128xf32>
    %21 = arith.mulf %19, %20 : vector<8x128xf32>
    %22 = vector.broadcast %9 : f32 to vector<8x128xf32>
    %23 = arith.subf %13, %22 : vector<8x128xf32>
    %24 = vector.broadcast %10 : f32 to vector<8x128xf32>
    %25 = arith.mulf %23, %24 : vector<8x128xf32>
    %26 = arith.mulf %17, %17 : vector<8x128xf32>
    %cst = arith.constant 0.000000e+00 : f32
    %27 = vector.broadcast %cst : f32 to vector<8x128xf32>
    %28 = arith.subf %27, %26 : vector<8x128xf32>
    %29 = math.exp %28 : vector<8x128xf32>
    %30 = vector.broadcast %2 : f32 to vector<8x128xf32>
    %31 = arith.mulf %30, %29 : vector<8x128xf32>
    %32 = vector.broadcast %0 : f32 to vector<8x128xf32>
    %33 = arith.addf %32, %31 : vector<8x128xf32>
    %34 = arith.mulf %21, %21 : vector<8x128xf32>
    %cst_2 = arith.constant 0.000000e+00 : f32
    %35 = vector.broadcast %cst_2 : f32 to vector<8x128xf32>
    %36 = arith.subf %35, %34 : vector<8x128xf32>
    %37 = math.exp %36 : vector<8x128xf32>
    %38 = vector.broadcast %5 : f32 to vector<8x128xf32>
    %39 = arith.mulf %38, %37 : vector<8x128xf32>
    %40 = arith.addf %33, %39 : vector<8x128xf32>
    %41 = arith.mulf %25, %25 : vector<8x128xf32>
    %cst_3 = arith.constant 0.000000e+00 : f32
    %42 = vector.broadcast %cst_3 : f32 to vector<8x128xf32>
    %43 = arith.subf %42, %41 : vector<8x128xf32>
    %44 = math.exp %43 : vector<8x128xf32>
    %45 = vector.broadcast %8 : f32 to vector<8x128xf32>
    %46 = arith.mulf %45, %44 : vector<8x128xf32>
    %47 = arith.addf %40, %46 : vector<8x128xf32>
    %cst_4 = arith.constant 9.99999997E-7 : f32
    %cst_5 = arith.constant 1.000000e+00 : f32
    %48 = vector.broadcast %cst_4 : f32 to vector<8x128xf32>
    %49 = arith.maximumf %48, %47 : vector<8x128xf32>
    %50 = vector.broadcast %cst_5 : f32 to vector<8x128xf32>
    %51 = arith.minimumf %50, %49 : vector<8x128xf32>
    %c0_6 = arith.constant 0 : index
    %c0_7 = arith.constant 0 : index
    %52 = vector.load %arg3[%c0_6, %c0_7] : memref<8x128xf32, #tpu.memory_space<vmem>>, vector<8x128xf32>
    tpu.vector_store %arg3[%c0_6, %c0_7], %51 {strides = array<i32>} : memref<8x128xf32, #tpu.memory_space<vmem>>, vector<8x128xf32>,
    return
  }
  func.func @transform_0(%arg0: i32, %arg1: memref<11xf32, #tpu.memory_space<smem>>) -> (i32, i32) {
    %c0_i32 = arith.constant 0 : i32
    %c0_i32_0 = arith.constant 0 : i32
    return %arg0, %c0_i32 : i32, i32
  }
  func.func @transform_1(%arg0: i32, %arg1: memref<11xf32, #tpu.memory_space<smem>>) -> (i32, i32) {
    %c0_i32 = arith.constant 0 : i32
    %c0_i32_0 = arith.constant 0 : i32
    return %arg0, %c0_i32 : i32, i32
  }
}

</mosaic_0001>

<llo_original>
// kernel: harmonic_spectral_filter.1
$region0: #{harmonic_spectral_filter.1}
  #allocation0 [shape = 'u32[]', space=smem, size = 0x4, offset = 0x4, fixed_abs, tag = 'smem constant byte address 0x4 - core index']
  #allocation1 [shape = 'u32[72,128]{1,0:T(1,128)}', space=vmem, size = 0x9000, scoped, tag = 'internal scratch']
  #allocation2 [shape = 's32[1]{0}', space=sflag, size = 0x4, scoped, tag = 'scoped memory for harmonic_spectral_filter.1']
  #allocation3 [shape = 'u8[512]{0}', space=smem, size = 0x200, scoped, tag = 'prefetched SMEM operand 0']
  %s0 = inlined_call_operand.vmem [shape: f32[11], index: 0, kind: input, shape index: {}]
  %s1 = inlined_call_operand.vmem [shape: f32[8,128], index: 1, kind: input, shape index: {}]
  %s2 = inlined_call_operand.vmem [shape: f32[8,128], index: 2, kind: output, shape index: {}]
  %s3 = sld [smem:[#allocation0]]
  $region14: #{harmonic_spectral_filter.1} parent=0
    _
  %s5 = ssub.s32 1, %s3
  %s6 = scalar_select 0, %s5, %s3
  %s8 = sshll.u32 %s0, 4
  %s9 = int_to_ptr.vmem [resolvable:$true] %s8
  %11 = dma.vmem_to_smem %s9, 16, [#allocation3], [#allocation2]
  %13 = dma.done [#allocation2], 16
  %14 = sfence
  // Predicated region
  $region2: #{harmonic_spectral_filter.1} parent=0 // pred_check
    _
  $region3: #{harmonic_spectral_filter.1} parent=0 // pred_check_branch
    %16 = sbr.rel (0) target = $region5
  $region4: #{harmonic_spectral_filter.1} parent=0 // pred_region
    _
  $region5: #{harmonic_spectral_filter.1} parent=0 // pred_fallthru
    _
  %s17 = sld [smem:[#allocation3]]
  %s18 = sld [smem:[#allocation3 + $0x1]]
  %s19 = sld [smem:[#allocation3 + $0x2]]
  %s20 = sld [smem:[#allocation3 + $0x3]]
  %s21 = sld [smem:[#allocation3 + $0x4]]
  %s22 = sld [smem:[#allocation3 + $0x5]]
  %s23 = sld [smem:[#allocation3 + $0x6]]
  %s24 = sld [smem:[#allocation3 + $0x7]]
  %s25 = sld [smem:[#allocation3 + $0x8]]
  %s26 = sld [smem:[#allocation3 + $0x9]]
  %s27 = sld [smem:[#allocation3 + $0xa]]
  %v28 = vld [vmem:[%s1] sm:$0xff]
  %v29 = vstv %s18
  %v30 = vmul.f32 %v28, %v29
  %v31 = vstv %s20
  %v32 = vsub.f32 %v30, %v31
  %v33 = vstv %s21
  %v34 = vmul.f32 %v32, %v33
  %v35 = vstv %s23
  %v36 = vsub.f32 %v30, %v35
  %v37 = vstv %s24
  %v38 = vmul.f32 %v36, %v37
  %v39 = vstv %s26
  %v40 = vsub.f32 %v30, %v39
  %v41 = vstv %s27
  %v42 = vmul.f32 %v40, %v41
  %v43 = vmul.f32 %v34, %v34
  %v44 = vsub.f32 0.0, %v43
  %v45 = vmul.f32 %v44, 1.442695
  %v46 = vpow.pop %v45
  %v47 = vstv %s19
  %v48 = vmul.f32 %v47, %v46
  %v49 = vstv %s17
  %v50 = vadd.f32 %v49, %v48
  %v51 = vmul.f32 %v38, %v38
  %v52 = vsub.f32 0.0, %v51
  %v53 = vmul.f32 %v52, 1.442695
  %v54 = vpow.pop %v53
  %v55 = vstv %s22
  %v56 = vmul.f32 %v55, %v54
  %v57 = vadd.f32 %v50, %v56
  %v58 = vmul.f32 %v42, %v42
  %v59 = vsub.f32 0.0, %v58
  %v60 = vmul.f32 %v59, 1.442695
  %v61 = vpow.pop %v60
  %v62 = vstv %s25
  %v63 = vmul.f32 %v62, %v61
  %v64 = vadd.f32 %v57, %v63
  %v65 = vmax.f32 %v64, 1e-06
  %v66 = vmin.f32 %v65, 1.0
  %67 = vst [vmem:[%s2] sm:$0xff] %v66
  // Predicated region
  $region6: #{harmonic_spectral_filter.1} parent=0 // pred_check
    _
  $region7: #{harmonic_spectral_filter.1} parent=0 // pred_check_branch
    %69 = sbr.rel (0) target = $region9
  $region8: #{harmonic_spectral_filter.1} parent=0 // pred_region
    _
  $region9: #{harmonic_spectral_filter.1} parent=0 // pred_fallthru
    _
  // Predicated region
  $region10: #{harmonic_spectral_filter.1} parent=0 // pred_check
    _
  $region11: #{harmonic_spectral_filter.1} parent=0 // pred_check_branch
    %71 = sbr.rel (0) target = $region13
  $region12: #{harmonic_spectral_filter.1} parent=0 // pred_region
    _
  $region13: #{harmonic_spectral_filter.1} parent=0 // pred_fallthru
    _

</llo_original>
